<compile_context>
chip_gen: v5e
topology: v5e:2x2
jax: 0.10.0
libtpu: 0.0.40
codegen_flags: <defaults>
</compile_context>

<pallas_src>
import jax
import jax.numpy as jnp
from jax.experimental import pallas as pl
from jax.experimental.pallas import tpu as pltpu

_LANE = 128


def _make_mlp_kernel(num_linear: int):
    """Fused MLP over one [1, TILE_B] slab of the batch (transposed layout)."""

    def kernel(*refs):
        x_ref = refs[0]            # (1, TILE_B)   input, feature dim = 1
        o_ref = refs[-1]           # (1, TILE_B)   output, feature dim = 1
        p = refs[1:-1]             # [w0, b0, w1, b1, ..., w_{n-1}, b_{n-1}]

        x = x_ref[...]             # already f32

        if num_linear == 1:
            # Single Linear(1 -> 1): pure scalar affine on the VPU.
            o_ref[...] = x * p[0][...] + p[1][...]
            return

        # ---- Layer 0 (in_features == 1): outer product on the VPU.  A K=1
        # MXU pass is per-pass inefficient; only move this if VALU saturates.
        w0 = p[0][...]                                  # (h0, 1)
        b0 = p[1][...]                                  # (h0, 1)
        h = jnp.maximum(w0 * x + b0, 0.0)               # (h0, TILE_B)

        # ---- Hidden -> hidden layers: MXU matmuls, f32 accumulation.
        for i in range(1, num_linear - 1):
            w = p[2 * i][...]                           # (out, in)
            b = p[2 * i + 1][...]                       # (out, 1)
            h = jnp.dot(w, h, preferred_element_type=jnp.float32) + b
            h = jnp.maximum(h, 0.0)                     # (out, TILE_B)

        # ---- Last layer (out_features == 1): (1,h) x (h,TILE_B) on the MXU
        # (frees the VALU/XLU slots that would do multiply + cross-sublane sum).
        wl = p[2 * (num_linear - 1)][...]               # (1, h_last)
        bl = p[2 * (num_linear - 1) + 1][...]           # (1, 1)
        o_ref[...] = jnp.dot(wl, h, preferred_element_type=jnp.float32) + bl

    return kernel


def _choose_tiling(batch: int, requested_tile_b: int, h_max: int):
    """Lane-dense, VMEM-budgeted batch tile; >=2 parallel tiles when possible."""
    batch_lanes = -(-batch // _LANE) * _LANE

    # VMEM budget for per-step activation slabs (conservative for v7x's
    # 64 MiB physical / 32 MiB default-scoped VMEM): ~3 live (h_max, tile_b)
    # f32 temps plus double-buffered (1, tile_b) x/out rows.
    act_budget = 24 * 1024 * 1024
    cap = act_budget // ((3 * h_max + 4) * 4)
    cap = max(_LANE, (cap // _LANE) * _LANE)

    tile_b = max(_LANE, (min(int(requested_tile_b), cap) // _LANE) * _LANE)

    num_tiles = -(-batch_lanes // tile_b)
    if num_tiles == 1 and batch_lanes >= 2 * _LANE:
        num_tiles = 2                      # keep both v7x TensorCores busy
    elif num_tiles > 2 and num_tiles % 2 == 1:
        num_tiles += 1                     # prefer an even split across 2 cores
    tile_b = -(-batch_lanes // num_tiles)
    tile_b = max(_LANE, -(-tile_b // _LANE) * _LANE)
    num_tiles = -(-batch_lanes // tile_b)
    padded = num_tiles * tile_b
    return tile_b, num_tiles, padded


def _run_pallas(xt, flat, n, tile_b, num_tiles, padded, shapes, h_max,
                single_buffer_params):
    act_spec = pl.BlockSpec((1, tile_b), lambda i: (0, i))

    param_kwargs = {}
    if single_buffer_params:
        # Constant index_maps -> never re-fetched; single-buffer so resident
        # params don't take 2x VMEM under the default pipeline.
        param_kwargs = dict(pipeline_mode=pl.Buffered(1))
    in_specs = [act_spec]
    for arr in flat:
        in_specs.append(pl.BlockSpec(arr.shape, lambda i: (0, 0), **param_kwargs))

    # Explicit VMEM limit: the default *scoped* limit (16 MiB on v5e) rejects
    # large tiles first; stay well under v7x's 64 MiB physical VMEM.
    param_bytes = sum(int(a.size) * 4 for a in flat)
    param_factor = 1 if single_buffer_params else 2
    est = (param_factor * param_bytes            # resident weights/biases
           + 2 * 2 * tile_b * 4                  # double-buffered x/out rows
           + 3 * h_max * tile_b * 4)             # live activation temps
    vmem_limit = int(min(max(int(1.5 * est) + (4 << 20), 32 << 20), 48 << 20))

    flops = 2 * padded * sum(i * o for i, o in shapes)
    bytes_accessed = 4 * (2 * padded + sum(i * o + o for i, o in shapes))
    cost = pl.CostEstimate(flops=flops, transcendentals=0,
                           bytes_accessed=bytes_accessed)

    return pl.pallas_call(
        _make_mlp_kernel(n),
        out_shape=jax.ShapeDtypeStruct((1, padded), jnp.float32),
        grid_spec=pltpu.PrefetchScalarGridSpec(
            num_scalar_prefetch=0,
            grid=(num_tiles,),
            in_specs=in_specs,
            out_specs=act_spec,
        ),
        compiler_params=pltpu.CompilerParams(
            dimension_semantics=("parallel",),
            vmem_limit_bytes=vmem_limit),
        cost_estimate=cost,
    )(xt, *flat)


def simple_nn_forward(x, params, tile_b: int = 4096):
    """Run the fused MLP Pallas kernel.

    x:      (batch, 1) float32   (same layout as the PyTorch module input)
    params: list of (w, b) with w: (in, out), b: (out,)  (PyTorch-equivalent)
    returns (batch, 1) float32
    """
    batch = int(x.shape[0])
    n = len(params)
    shapes = [(int(w.shape[0]), int(w.shape[1])) for w, _ in params]
    h_max = max(max(i, o) for i, o in shapes)

    tile_b, num_tiles, padded = _choose_tiling(batch, tile_b, h_max)

    # Lane-dense layout: activations live as [features, batch].
    xt = x.astype(jnp.float32).reshape(1, batch)
    if padded != batch:
        xt = jnp.pad(xt, ((0, 0), (0, padded - batch)))

    # ---- re-layout parameters for the transposed ([features, batch]) compute.
    flat = []
    for idx, (w, b) in enumerate(params):
        in_dim, out_dim = shapes[idx]
        if n == 1:
            wk = jnp.reshape(w, (1, 1))              # Linear(1 -> 1)
        elif idx == 0:
            wk = jnp.reshape(w, (out_dim, 1))        # (1, h0)     -> (h0, 1)
        elif idx == n - 1:
            wk = jnp.reshape(w, (1, in_dim))         # (h_last, 1) -> (1, h_last)
        else:
            wk = w.T                                 # (in, out)   -> (out, in)
        flat.append(wk.astype(jnp.float32))
        flat.append(jnp.reshape(b, (out_dim, 1)).astype(jnp.float32))

    try:
        y = _run_pallas(xt, flat, n, tile_b, num_tiles, padded, shapes, h_max,
                        single_buffer_params=True)
        y = jax.block_until_ready(y)
    except Exception:
        # Fallback if pl.Buffered(1) is rejected on this JAX/Mosaic version:
        # default double-buffered params (negligible VMEM at these sizes).
        y = _run_pallas(xt, flat, n, tile_b, num_tiles, padded, shapes, h_max,
                        single_buffer_params=False)

    return y[0, :batch].reshape(batch, 1)


def init_params(hidden_dims, key):
    """PyTorch-like nn.Linear init: w (in, out), b (out,), uniform(+-1/sqrt(in))."""
    params = []
    in_dim = 1
    dims = [int(h) for h in hidden_dims] + [1]
    for out_dim in dims:
        key, kw, kb = jax.random.split(key, 3)
        bound = 1.0 / (in_dim ** 0.5)
        w = jax.random.uniform(kw, (in_dim, out_dim), jnp.float32, -bound, bound)
        b = jax.random.uniform(kb, (out_dim,), jnp.float32, -bound, bound)
        params.append((w, b))
        in_dim = out_dim
    return params


def reference_forward(x, params):
    h = x
    n = len(params)
    for i, (w, b) in enumerate(params):
        h = h @ w + b
        if i < n - 1:
            h = jnp.maximum(h, 0.0)
    return h


if __name__ == "__main__":
    key = jax.random.PRNGKey(0)
    hidden_dims = [32, 64]          # SimpleNN(hidden_dims=[32, 64])
    batch = 300                     # not a tile multiple -> exercises padding
                                    # and splits into 2 parallel 256-lane tiles

    key, kx, kp = jax.random.split(key, 3)
    x = jax.random.normal(kx, (batch, 1), jnp.float32)
    params = init_params(hidden_dims, kp)

    out = simple_nn_forward(x, params)
    out = jax.block_until_ready(out)

    ref = reference_forward(x, params)
    assert out.shape == (batch, 1)
    assert jnp.allclose(out, ref, atol=1e-4, rtol=1e-4)

    print("KERNEL_OK")
</pallas_src>

<mosaic_0001>
module attributes {stable_mosaic.version = 11 : i64} {
  func.func @kernel(%arg0: i32, %arg1: memref<1x256xf32, #tpu.memory_space<vmem>>, %arg2: memref<32x1xf32, #tpu.memory_space<vmem>>, %arg3: memref<32x1xf32, #tpu.memory_space<vmem>>, %arg4: memref<64x32xf32, #tpu.memory_space<vmem>>, %arg5: memref<64x1xf32, #tpu.memory_space<vmem>>, %arg6: memref<1x64xf32, #tpu.memory_space<vmem>>, %arg7: memref<1x1xf32, #tpu.memory_space<vmem>>, %arg8: memref<1x256xf32, #tpu.memory_space<vmem>>) attributes {dimension_semantics = [#tpu.dimension_semantics<parallel>], iteration_bounds = array<i64: 2>, scalar_prefetch = 0 : i64, scratch_operands = 0 : i64, tpu.core_type = #tpu.core_type<tc>, window_params = [{transform_indices = @transform_0, window_bounds = array<i64: 1, 256>}, {pipeline_mode = #tpu.pipeline_mode<synchronous>, transform_indices = @transform_1, window_bounds = array<i64: 32, 1>}, {pipeline_mode = #tpu.pipeline_mode<synchronous>, transform_indices = @transform_2, window_bounds = array<i64: 32, 1>}, {pipeline_mode = #tpu.pipeline_mode<synchronous>, transform_indices = @transform_3, window_bounds = array<i64: 64, 32>}, {pipeline_mode = #tpu.pipeline_mode<synchronous>, transform_indices = @transform_4, window_bounds = array<i64: 64, 1>}, {pipeline_mode = #tpu.pipeline_mode<synchronous>, transform_indices = @transform_5, window_bounds = array<i64: 1, 64>}, {pipeline_mode = #tpu.pipeline_mode<synchronous>, transform_indices = @transform_6, window_bounds = array<i64: 1, 1>}, {transform_indices = @transform_7, window_bounds = array<i64: 1, 256>}]} {
    %c0 = arith.constant 0 : index
    %c0_0 = arith.constant 0 : index
    %0 = vector.load %arg1[%c0, %c0_0] : memref<1x256xf32, #tpu.memory_space<vmem>>, vector<1x256xf32>
    %c0_1 = arith.constant 0 : index
    %c0_2 = arith.constant 0 : index
    %1 = vector.load %arg2[%c0_1, %c0_2] : memref<32x1xf32, #tpu.memory_space<vmem>>, vector<32x1xf32>
    %c0_3 = arith.constant 0 : index
    %c0_4 = arith.constant 0 : index
    %2 = vector.load %arg3[%c0_3, %c0_4] : memref<32x1xf32, #tpu.memory_space<vmem>>, vector<32x1xf32>
    %3 = vector.broadcast %1 : vector<32x1xf32> to vector<32x256xf32>
    %4 = vector.broadcast %0 : vector<1x256xf32> to vector<32x256xf32>
    %5 = arith.mulf %3, %4 : vector<32x256xf32>
    %6 = vector.broadcast %2 : vector<32x1xf32> to vector<32x256xf32>
    %7 = arith.addf %5, %6 : vector<32x256xf32>
    %cst = arith.constant 0.000000e+00 : f32
    %8 = vector.broadcast %cst : f32 to vector<32x256xf32>
    %9 = arith.maximumf %7, %8 : vector<32x256xf32>
    %c0_5 = arith.constant 0 : index
    %c0_6 = arith.constant 0 : index
    %10 = vector.load %arg4[%c0_5, %c0_6] : memref<64x32xf32, #tpu.memory_space<vmem>>, vector<64x32xf32>
    %c0_7 = arith.constant 0 : index
    %c0_8 = arith.constant 0 : index
    %11 = vector.load %arg5[%c0_7, %c0_8] : memref<64x1xf32, #tpu.memory_space<vmem>>, vector<64x1xf32>
    %cst_9 = arith.constant dense<0.000000e+00> : vector<64x256xf32>
    %12 = tpu.matmul %10, %9, %cst_9 {dimension_numbers = #tpu.dot_dimension_numbers<[1], [0], [0], [1], [0, 0, 1, 1], [], []>} : vector<64x32xf32>, vector<32x256xf32>, vector<64x256xf32> -> vector<64x256xf32>
    %13 = vector.broadcast %11 : vector<64x1xf32> to vector<64x256xf32>
    %14 = arith.addf %12, %13 : vector<64x256xf32>
    %cst_10 = arith.constant 0.000000e+00 : f32
    %15 = vector.broadcast %cst_10 : f32 to vector<64x256xf32>
    %16 = arith.maximumf %14, %15 : vector<64x256xf32>
    %c0_11 = arith.constant 0 : index
    %c0_12 = arith.constant 0 : index
    %17 = vector.load %arg6[%c0_11, %c0_12] : memref<1x64xf32, #tpu.memory_space<vmem>>, vector<1x64xf32>
    %c0_13 = arith.constant 0 : index
    %c0_14 = arith.constant 0 : index
    %18 = vector.load %arg7[%c0_13, %c0_14] : memref<1x1xf32, #tpu.memory_space<vmem>>, vector<1x1xf32>
    %cst_15 = arith.constant dense<0.000000e+00> : vector<1x256xf32>
    %19 = tpu.matmul %17, %16, %cst_15 {dimension_numbers = #tpu.dot_dimension_numbers<[1], [0], [0], [1], [0, 0, 1, 1], [], []>} : vector<1x64xf32>, vector<64x256xf32>, vector<1x256xf32> -> vector<1x256xf32>
    %20 = vector.broadcast %18 : vector<1x1xf32> to vector<1x256xf32>
    %21 = arith.addf %19, %20 : vector<1x256xf32>
    %c0_16 = arith.constant 0 : index
    %c0_17 = arith.constant 0 : index
    %22 = vector.load %arg8[%c0_16, %c0_17] : memref<1x256xf32, #tpu.memory_space<vmem>>, vector<1x256xf32>
    tpu.vector_store %arg8[%c0_16, %c0_17], %21 {strides = array<i32>} : memref<1x256xf32, #tpu.memory_space<vmem>>, vector<1x256xf32>,
    return
  }
  func.func @transform_0(%arg0: i32) -> (i32, i32) {
    %c0_i32 = arith.constant 0 : i32
    %c0_i32_0 = arith.constant 0 : i32
    return %c0_i32, %arg0 : i32, i32
  }
  func.func @transform_1(%arg0: i32) -> (i32, i32) {
    %c0_i32 = arith.constant 0 : i32
    %c0_i32_0 = arith.constant 0 : i32
    %c0_i32_1 = arith.constant 0 : i32
    return %c0_i32, %c0_i32_0 : i32, i32
  }
  func.func @transform_2(%arg0: i32) -> (i32, i32) {
    %c0_i32 = arith.constant 0 : i32
    %c0_i32_0 = arith.constant 0 : i32
    %c0_i32_1 = arith.constant 0 : i32
    return %c0_i32, %c0_i32_0 : i32, i32
  }
  func.func @transform_3(%arg0: i32) -> (i32, i32) {
    %c0_i32 = arith.constant 0 : i32
    %c0_i32_0 = arith.constant 0 : i32
    %c0_i32_1 = arith.constant 0 : i32
    return %c0_i32, %c0_i32_0 : i32, i32
  }
  func.func @transform_4(%arg0: i32) -> (i32, i32) {
    %c0_i32 = arith.constant 0 : i32
    %c0_i32_0 = arith.constant 0 : i32
    %c0_i32_1 = arith.constant 0 : i32
    return %c0_i32, %c0_i32_0 : i32, i32
  }
  func.func @transform_5(%arg0: i32) -> (i32, i32) {
    %c0_i32 = arith.constant 0 : i32
    %c0_i32_0 = arith.constant 0 : i32
    %c0_i32_1 = arith.constant 0 : i32
    return %c0_i32, %c0_i32_0 : i32, i32
  }
  func.func @transform_6(%arg0: i32) -> (i32, i32) {
    %c0_i32 = arith.constant 0 : i32
    %c0_i32_0 = arith.constant 0 : i32
    %c0_i32_1 = arith.constant 0 : i32
    return %c0_i32, %c0_i32_0 : i32, i32
  }
  func.func @transform_7(%arg0: i32) -> (i32, i32) {
    %c0_i32 = arith.constant 0 : i32
    %c0_i32_0 = arith.constant 0 : i32
    return %c0_i32, %arg0 : i32, i32
  }
}

module attributes {stable_mosaic.version = 11 : i64} {
  func.func @kernel(%arg0: i32, %arg1: memref<1x256xf32, #tpu.memory_space<vmem>>, %arg2: memref<32x1xf32, #tpu.memory_space<vmem>>, %arg3: memref<32x1xf32, #tpu.memory_space<vmem>>, %arg4: memref<64x32xf32, #tpu.memory_space<vmem>>, %arg5: memref<64x1xf32, #tpu.memory_space<vmem>>, %arg6: memref<1x64xf32, #tpu.memory_space<vmem>>, %arg7: memref<1x1xf32, #tpu.memory_space<vmem>>, %arg8: memref<1x256xf32, #tpu.memory_space<vmem>>) attributes {dimension_semantics = [#tpu.dimension_semantics<parallel>], iteration_bounds = array<i64: 2>, scalar_prefetch = 0 : i64, scratch_operands = 0 : i64, tpu.core_type = #tpu.core_type<tc>, window_params = [{transform_indices = @transform_0, window_bounds = array<i64: 1, 256>}, {pipeline_mode = #tpu.pipeline_mode<synchronous>, transform_indices = @transform_1, window_bounds = array<i64: 32, 1>}, {pipeline_mode = #tpu.pipeline_mode<synchronous>, transform_indices = @transform_2, window_bounds = array<i64: 32, 1>}, {pipeline_mode = #tpu.pipeline_mode<synchronous>, transform_indices = @transform_3, window_bounds = array<i64: 64, 32>}, {pipeline_mode = #tpu.pipeline_mode<synchronous>, transform_indices = @transform_4, window_bounds = array<i64: 64, 1>}, {pipeline_mode = #tpu.pipeline_mode<synchronous>, transform_indices = @transform_5, window_bounds = array<i64: 1, 64>}, {pipeline_mode = #tpu.pipeline_mode<synchronous>, transform_indices = @transform_6, window_bounds = array<i64: 1, 1>}, {transform_indices = @transform_7, window_bounds = array<i64: 1, 256>}]} {
    %c0 = arith.constant 0 : index
    %c0_0 = arith.constant 0 : index
    %0 = vector.load %arg1[%c0, %c0_0] : memref<1x256xf32, #tpu.memory_space<vmem>>, vector<1x256xf32>
    %c0_1 = arith.constant 0 : index
    %c0_2 = arith.constant 0 : index
    %1 = vector.load %arg2[%c0_1, %c0_2] : memref<32x1xf32, #tpu.memory_space<vmem>>, vector<32x1xf32>
    %c0_3 = arith.constant 0 : index
    %c0_4 = arith.constant 0 : index
    %2 = vector.load %arg3[%c0_3, %c0_4] : memref<32x1xf32, #tpu.memory_space<vmem>>, vector<32x1xf32>
    %3 = vector.broadcast %1 : vector<32x1xf32> to vector<32x256xf32>
    %4 = vector.broadcast %0 : vector<1x256xf32> to vector<32x256xf32>
    %5 = arith.mulf %3, %4 : vector<32x256xf32>
    %6 = vector.broadcast %2 : vector<32x1xf32> to vector<32x256xf32>
    %7 = arith.addf %5, %6 : vector<32x256xf32>
    %cst = arith.constant 0.000000e+00 : f32
    %8 = vector.broadcast %cst : f32 to vector<32x256xf32>
    %9 = arith.maximumf %7, %8 : vector<32x256xf32>
    %c0_5 = arith.constant 0 : index
    %c0_6 = arith.constant 0 : index
    %10 = vector.load %arg4[%c0_5, %c0_6] : memref<64x32xf32, #tpu.memory_space<vmem>>, vector<64x32xf32>
    %c0_7 = arith.constant 0 : index
    %c0_8 = arith.constant 0 : index
    %11 = vector.load %arg5[%c0_7, %c0_8] : memref<64x1xf32, #tpu.memory_space<vmem>>, vector<64x1xf32>
    %cst_9 = arith.constant dense<0.000000e+00> : vector<64x256xf32>
    %12 = tpu.matmul %10, %9, %cst_9 {dimension_numbers = #tpu.dot_dimension_numbers<[1], [0], [0], [1], [0, 0, 1, 1], [], []>} : vector<64x32xf32>, vector<32x256xf32>, vector<64x256xf32> -> vector<64x256xf32>
    %13 = vector.broadcast %11 : vector<64x1xf32> to vector<64x256xf32>
    %14 = arith.addf %12, %13 : vector<64x256xf32>
    %cst_10 = arith.constant 0.000000e+00 : f32
    %15 = vector.broadcast %cst_10 : f32 to vector<64x256xf32>
    %16 = arith.maximumf %14, %15 : vector<64x256xf32>
    %c0_11 = arith.constant 0 : index
    %c0_12 = arith.constant 0 : index
    %17 = vector.load %arg6[%c0_11, %c0_12] : memref<1x64xf32, #tpu.memory_space<vmem>>, vector<1x64xf32>
    %c0_13 = arith.constant 0 : index
    %c0_14 = arith.constant 0 : index
    %18 = vector.load %arg7[%c0_13, %c0_14] : memref<1x1xf32, #tpu.memory_space<vmem>>, vector<1x1xf32>
    %cst_15 = arith.constant dense<0.000000e+00> : vector<1x256xf32>
    %19 = tpu.matmul %17, %16, %cst_15 {dimension_numbers = #tpu.dot_dimension_numbers<[1], [0], [0], [1], [0, 0, 1, 1], [], []>} : vector<1x64xf32>, vector<64x256xf32>, vector<1x256xf32> -> vector<1x256xf32>
    %20 = vector.broadcast %18 : vector<1x1xf32> to vector<1x256xf32>
    %21 = arith.addf %19, %20 : vector<1x256xf32>
    %c0_16 = arith.constant 0 : index
    %c0_17 = arith.constant 0 : index
    %22 = vector.load %arg8[%c0_16, %c0_17] : memref<1x256xf32, #tpu.memory_space<vmem>>, vector<1x256xf32>
    tpu.vector_store %arg8[%c0_16, %c0_17], %21 {strides = array<i32>} : memref<1x256xf32, #tpu.memory_space<vmem>>, vector<1x256xf32>,
    return
  }
  func.func @transform_0(%arg0: i32) -> (i32, i32) {
    %c0_i32 = arith.constant 0 : i32
    %c0_i32_0 = arith.constant 0 : i32
    return %c0_i32, %arg0 : i32, i32
  }
  func.func @transform_1(%arg0: i32) -> (i32, i32) {
    %c0_i32 = arith.constant 0 : i32
    %c0_i32_0 = arith.constant 0 : i32
    %c0_i32_1 = arith.constant 0 : i32
    return %c0_i32, %c0_i32_0 : i32, i32
  }
  func.func @transform_2(%arg0: i32) -> (i32, i32) {
    %c0_i32 = arith.constant 0 : i32
    %c0_i32_0 = arith.constant 0 : i32
    %c0_i32_1 = arith.constant 0 : i32
    return %c0_i32, %c0_i32_0 : i32, i32
  }
  func.func @transform_3(%arg0: i32) -> (i32, i32) {
    %c0_i32 = arith.constant 0 : i32
    %c0_i32_0 = arith.constant 0 : i32
    %c0_i32_1 = arith.constant 0 : i32
    return %c0_i32, %c0_i32_0 : i32, i32
  }
  func.func @transform_4(%arg0: i32) -> (i32, i32) {
    %c0_i32 = arith.constant 0 : i32
    %c0_i32_0 = arith.constant 0 : i32
    %c0_i32_1 = arith.constant 0 : i32
    return %c0_i32, %c0_i32_0 : i32, i32
  }
  func.func @transform_5(%arg0: i32) -> (i32, i32) {
    %c0_i32 = arith.constant 0 : i32
    %c0_i32_0 = arith.constant 0 : i32
    %c0_i32_1 = arith.constant 0 : i32
    return %c0_i32, %c0_i32_0 : i32, i32
  }
  func.func @transform_6(%arg0: i32) -> (i32, i32) {
    %c0_i32 = arith.constant 0 : i32
    %c0_i32_0 = arith.constant 0 : i32
    %c0_i32_1 = arith.constant 0 : i32
    return %c0_i32, %c0_i32_0 : i32, i32
  }
  func.func @transform_7(%arg0: i32) -> (i32, i32) {
    %c0_i32 = arith.constant 0 : i32
    %c0_i32_0 = arith.constant 0 : i32
    return %c0_i32, %arg0 : i32, i32
  }
}

</mosaic_0001>

<llo_original>
// kernel: tpu_custom_call.1
$region0: #{tpu_custom_call.1}
  #allocation0 [shape = 'u32[]', space=smem, size = 0x4, offset = 0x4, fixed_abs, tag = 'smem constant byte address 0x4 - core index']
  #allocation1 [shape = 'u32[72,128]{1,0:T(1,128)}', space=vmem, size = 0x9000, scoped, tag = 'internal scratch']
  #allocation2 [shape = 'f32[1,1]{1,0:T(1,128)S(1)}', space=vmem, size = 0x200, scoped, tag = 'scoped memory for tpu_custom_call.1']
  %s0 = inlined_call_operand.vmem [shape: f32[1,512], index: 0, kind: input, shape index: {}]
  %s1 = inlined_call_operand.vmem [shape: f32[32,1], index: 1, kind: input, shape index: {}]
  %s2 = inlined_call_operand.vmem [shape: f32[32,1], index: 2, kind: input, shape index: {}]
  %s3 = inlined_call_operand.vmem [shape: f32[64,32], index: 3, kind: input, shape index: {}]
  %s4 = inlined_call_operand.vmem [shape: f32[64,1], index: 4, kind: input, shape index: {}]
  %s5 = inlined_call_operand.vmem [shape: f32[1,64], index: 5, kind: input, shape index: {}]
  %s6 = inlined_call_operand.<no memory space> [shape: f32[1,1], index: 6, kind: input, shape index: {}]
  %s7 = inlined_call_operand.hbm [shape: f32[1,512], index: 7, kind: output, shape index: {}]
  %s8 = sld [smem:[#allocation0]]
  $region61: #{tpu_custom_call.1} parent=0
    _
  %s10 = ssub.s32 1, %s8
  %s11 = scalar_select 0, %s10, %s8
  %v12 = vstv %s6
  %13 = vst [vmem:[#allocation2] sm:$0x1] %v12
  $region1: #{tpu_custom_call.1} parent=0
    #allocation3 [shape = 'u8[2048]{0}', space=vmem, size = 0x800, scoped, tag = 'output window, operand 0']
    #allocation4 [shape = 's32[2]{0}', space=sflag, size = 0x8, scoped, tag = 'scoped memory for tpu_custom_call.1']
    %14 = vsyncpa [#allocation4], 0
    %s15 = scalar_lea.sflag [#allocation4], 1
    %16 = vsyncpa %s15, 0
    loop: start=0, step=1, limit=4
    $region2: #{tpu_custom_call.1} parent=1 // loop_pre_header
      _
    $region3: #{tpu_custom_call.1} parent=1 // loop_header
      %s18 = sphi 0, %s22
      %p19 = scmp.ge.s32.totalorder %s18, 4
      %s28 = sphi 0, %s30
      %s31 = sphi 0, %s28
      %s32 = sphi 0, %s31
      %s48 = sphi 0, %s32
      %s52 = sphi 0, %s52
      %s54 = sphi 0, %s52
      %s55 = sphi 0, %s54
      %s69 = sphi 0, %s55
      %s73 = sphi 0, %s73
      %s75 = sphi 0, %s73
      %s76 = sphi 0, %s75
      %s90 = sphi 0, %s76
      %s94 = sphi 0, %s94
      %s96 = sphi 0, %s94
      %s97 = sphi 0, %s96
      %s111 = sphi 0, %s97
      %s115 = sphi 0, %s115
      %s117 = sphi 0, %s115
      %s118 = sphi 0, %s117
      %s132 = sphi 0, %s118
      %s136 = sphi 0, %s136
      %s138 = sphi 0, %s136
      %s139 = sphi 0, %s138
      %s153 = sphi 0, %s139
      %s157 = sphi 0, %s157
      %s159 = sphi 0, %s157
      %s160 = sphi 0, %s159
      %s174 = sphi 0, %s160
      %s180 = sphi 0, %s182
      %s183 = sphi 0, %s180
      %s184 = sphi 0, %s183
      %s200 = sphi 0, %s184
    $region4: #{tpu_custom_call.1} parent=1 // loop_header_branch
      %21 = sbr.rel (%p19) target = $region8
    $region5: #{tpu_custom_call.1} parent=1 // loop_body
      %s23 = ssub.s32 %s18, 1
      %s24 = ssub.s32 %s18, 2
      %s25 = sadd.s32 %s18, 1
      %s26 = ssub.s32 %s18, %s25
      %p27 = scmp.eq.s32.totalorder %s26, 0
      %s29 = sadd.s32 %s28, 1
      %s30 = scalar_select %p27, %s28, %s29
      %p33 = pneg %p27
      %p34 = scmp.eq.s32.totalorder %s18, 1
      %p35 = por %p33, %p34
      %p36 = scmp.ne.s32.totalorder %s28, %s31
      %p37 = scmp.eq.s32.totalorder %s18, 0
      %p38 = por %p36, %p37
      %p39 = scmp.ne.s32.totalorder %s28, %s31
      %p40 = scmp.eq.s32.totalorder %s23, 1
      %p41 = por %p39, %p40
      %p42 = scmp.ne.s32.totalorder %s31, %s32
      %p43 = scmp.eq.s32.totalorder %s23, 0
      %p44 = por %p42, %p43
      %p45 = scmp.ne.s32.totalorder %s31, %s32
      %p46 = scmp.eq.s32.totalorder %s24, 1
      %p47 = por %p45, %p46
      %p49 = scmp.ne.s32.totalorder %s32, %s48
      %p50 = scmp.eq.s32.totalorder %s24, 0
      %p51 = por %p49, %p50
      %s53 = sadd.s32 %s52, 1
      %p56 = scmp.eq.s32.totalorder %s18, 1
      %p57 = scmp.ne.s32.totalorder %s52, %s54
      %p58 = scmp.eq.s32.totalorder %s18, 0
      %p59 = por %p57, %p58
      %p60 = scmp.ne.s32.totalorder %s52, %s54
      %p61 = scmp.eq.s32.totalorder %s23, 1
      %p62 = por %p60, %p61
      %p63 = scmp.ne.s32.totalorder %s54, %s55
      %p64 = scmp.eq.s32.totalorder %s23, 0
      %p65 = por %p63, %p64
      %p66 = scmp.ne.s32.totalorder %s54, %s55
      %p67 = scmp.eq.s32.totalorder %s24, 1
      %p68 = por %p66, %p67
      %p70 = scmp.ne.s32.totalorder %s55, %s69
      %p71 = scmp.eq.s32.totalorder %s24, 0
      %p72 = por %p70, %p71
      %s74 = sadd.s32 %s73, 1
      %p77 = scmp.eq.s32.totalorder %s18, 1
      %p78 = scmp.ne.s32.totalorder %s73, %s75
      %p79 = scmp.eq.s32.totalorder %s18, 0
      %p80 = por %p78, %p79
      %p81 = scmp.ne.s32.totalorder %s73, %s75
      %p82 = scmp.eq.s32.totalorder %s23, 1
      %p83 = por %p81, %p82
      %p84 = scmp.ne.s32.totalorder %s75, %s76
      %p85 = scmp.eq.s32.totalorder %s23, 0
      %p86 = por %p84, %p85
      %p87 = scmp.ne.s32.totalorder %s75, %s76
      %p88 = scmp.eq.s32.totalorder %s24, 1
      %p89 = por %p87, %p88
      %p91 = scmp.ne.s32.totalorder %s76, %s90
      %p92 = scmp.eq.s32.totalorder %s24, 0
      %p93 = por %p91, %p92
      %s95 = sadd.s32 %s94, 1
      %p98 = scmp.eq.s32.totalorder %s18, 1
      %p99 = scmp.ne.s32.totalorder %s94, %s96
      %p100 = scmp.eq.s32.totalorder %s18, 0
      %p101 = por %p99, %p100
      %p102 = scmp.ne.s32.totalorder %s94, %s96
      %p103 = scmp.eq.s32.totalorder %s23, 1
      %p104 = por %p102, %p103
      %p105 = scmp.ne.s32.totalorder %s96, %s97
      %p106 = scmp.eq.s32.totalorder %s23, 0
      %p107 = por %p105, %p106
      %p108 = scmp.ne.s32.totalorder %s96, %s97
      %p109 = scmp.eq.s32.totalorder %s24, 1
      %p110 = por %p108, %p109
      %p112 = scmp.ne.s32.totalorder %s97, %s111
      %p113 = scmp.eq.s32.totalorder %s24, 0
      %p114 = por %p112, %p113
      %s116 = sadd.s32 %s115, 1
      %p119 = scmp.eq.s32.totalorder %s18, 1
      %p120 = scmp.ne.s32.totalorder %s115, %s117
      %p121 = scmp.eq.s32.totalorder %s18, 0
      %p122 = por %p120, %p121
      %p123 = scmp.ne.s32.totalorder %s115, %s117
      %p124 = scmp.eq.s32.totalorder %s23, 1
      %p125 = por %p123, %p124
      %p126 = scmp.ne.s32.totalorder %s117, %s118
      %p127 = scmp.eq.s32.totalorder %s23, 0
      %p128 = por %p126, %p127
      %p129 = scmp.ne.s32.totalorder %s117, %s118
      %p130 = scmp.eq.s32.totalorder %s24, 1
      %p131 = por %p129, %p130
      %p133 = scmp.ne.s32.totalorder %s118, %s132
      %p134 = scmp.eq.s32.totalorder %s24, 0
      %p135 = por %p133, %p134
      %s137 = sadd.s32 %s136, 1
      %p140 = scmp.eq.s32.totalorder %s18, 1
      %p141 = scmp.ne.s32.totalorder %s136, %s138
      %p142 = scmp.eq.s32.totalorder %s18, 0
      %p143 = por %p141, %p142
      %p144 = scmp.ne.s32.totalorder %s136, %s138
      %p145 = scmp.eq.s32.totalorder %s23, 1
      %p146 = por %p144, %p145
      %p147 = scmp.ne.s32.totalorder %s138, %s139
      %p148 = scmp.eq.s32.totalorder %s23, 0
      %p149 = por %p147, %p148
      %p150 = scmp.ne.s32.totalorder %s138, %s139
      %p151 = scmp.eq.s32.totalorder %s24, 1
      %p152 = por %p150, %p151
      %p154 = scmp.ne.s32.totalorder %s139, %s153
      %p155 = scmp.eq.s32.totalorder %s24, 0
      %p156 = por %p154, %p155
      %s158 = sadd.s32 %s157, 1
      %p161 = scmp.eq.s32.totalorder %s18, 1
      %p162 = scmp.ne.s32.totalorder %s157, %s159
      %p163 = scmp.eq.s32.totalorder %s18, 0
      %p164 = por %p162, %p163
      %p165 = scmp.ne.s32.totalorder %s157, %s159
      %p166 = scmp.eq.s32.totalorder %s23, 1
      %p167 = por %p165, %p166
      %p168 = scmp.ne.s32.totalorder %s159, %s160
      %p169 = scmp.eq.s32.totalorder %s23, 0
      %p170 = por %p168, %p169
      %p171 = scmp.ne.s32.totalorder %s159, %s160
      %p172 = scmp.eq.s32.totalorder %s24, 1
      %p173 = por %p171, %p172
      %p175 = scmp.ne.s32.totalorder %s160, %s174
      %p176 = scmp.eq.s32.totalorder %s24, 0
      %p177 = por %p175, %p176
      %s178 = ssub.s32 %s18, %s25
      %p179 = scmp.eq.s32.totalorder %s178, 0
      %s181 = sadd.s32 %s180, 1
      %s182 = scalar_select %p179, %s180, %s181
      %p185 = pneg %p179
      %p186 = scmp.eq.s32.totalorder %s18, 1
      %p187 = por %p185, %p186
      %p188 = scmp.ne.s32.totalorder %s180, %s183
      %p189 = scmp.eq.s32.totalorder %s18, 0
      %p190 = por %p188, %p189
      %p191 = scmp.ne.s32.totalorder %s180, %s183
      %p192 = scmp.eq.s32.totalorder %s23, 1
      %p193 = por %p191, %p192
      %p194 = scmp.ne.s32.totalorder %s183, %s184
      %p195 = scmp.eq.s32.totalorder %s23, 0
      %p196 = por %p194, %p195
      %p197 = scmp.ne.s32.totalorder %s183, %s184
      %p198 = scmp.eq.s32.totalorder %s24, 1
      %p199 = por %p197, %p198
      %p201 = scmp.ne.s32.totalorder %s184, %s200
      %p202 = scmp.eq.s32.totalorder %s24, 0
      %p203 = por %p201, %p202
      %p204 = scmp.le.s32.totalorder 1, %s18
      %p205 = scmp.lt.s32.totalorder %s18, 3
      %p206 = pnand %p204, %p205
      %p207 = pneg %p206
      // Predicated region
      $region9: #{tpu_custom_call.1} parent=5 // pred_check
        _
      $region10: #{tpu_custom_call.1} parent=5 // pred_check_branch
        %209 = sbr.rel (%p206) target = $region12
      $region11: #{tpu_custom_call.1} parent=5 // pred_region
        %s210 = ssub.s32 %s18, 1
        // Predicated region
        $region13: #{tpu_custom_call.1} parent=11 // pred_check
          %p211 = pneg %p65
        $region14: #{tpu_custom_call.1} parent=11 // pred_check_branch
          %213 = sbr.rel (%p211) target = $region16
        $region15: #{tpu_custom_call.1} parent=11 // pred_region
          _
        $region16: #{tpu_custom_call.1} parent=11 // pred_fallthru
          _
        // Predicated region
        $region17: #{tpu_custom_call.1} parent=11 // pred_check
          %p214 = pneg %p86
        $region18: #{tpu_custom_call.1} parent=11 // pred_check_branch
          %216 = sbr.rel (%p214) target = $region20
        $region19: #{tpu_custom_call.1} parent=11 // pred_region
          _
        $region20: #{tpu_custom_call.1} parent=11 // pred_fallthru
          _
        // Predicated region
        $region21: #{tpu_custom_call.1} parent=11 // pred_check
          %p217 = pneg %p107
        $region22: #{tpu_custom_call.1} parent=11 // pred_check_branch
          %219 = sbr.rel (%p217) target = $region24
        $region23: #{tpu_custom_call.1} parent=11 // pred_region
          _
        $region24: #{tpu_custom_call.1} parent=11 // pred_fallthru
          _
        // Predicated region
        $region25: #{tpu_custom_call.1} parent=11 // pred_check
          %p220 = pneg %p128
        $region26: #{tpu_custom_call.1} parent=11 // pred_check_branch
          %222 = sbr.rel (%p220) target = $region28
        $region27: #{tpu_custom_call.1} parent=11 // pred_region
          _
        $region28: #{tpu_custom_call.1} parent=11 // pred_fallthru
          _
        // Predicated region
        $region29: #{tpu_custom_call.1} parent=11 // pred_check
          %p223 = pneg %p149
        $region30: #{tpu_custom_call.1} parent=11 // pred_check_branch
          %225 = sbr.rel (%p223) target = $region32
        $region31: #{tpu_custom_call.1} parent=11 // pred_region
          _
        $region32: #{tpu_custom_call.1} parent=11 // pred_fallthru
          _
        // Predicated region
        $region33: #{tpu_custom_call.1} parent=11 // pred_check
          %p226 = pneg %p170
        $region34: #{tpu_custom_call.1} parent=11 // pred_check_branch
          %228 = sbr.rel (%p226) target = $region36
        $region35: #{tpu_custom_call.1} parent=11 // pred_region
          _
        $region36: #{tpu_custom_call.1} parent=11 // pred_fallthru
          _
      $region12: #{tpu_custom_call.1} parent=5 // pred_fallthru
        _
      %p229 = scmp.lt.s32.totalorder %s18, 2
      // Predicated region
      $region37: #{tpu_custom_call.1} parent=5 // pred_check
        %p230 = pneg %p229
      $region38: #{tpu_custom_call.1} parent=5 // pred_check_branch
        %232 = sbr.rel (%p230) target = $region40
      $region39: #{tpu_custom_call.1} parent=5 // pred_region
        // Predicated region
        $region41: #{tpu_custom_call.1} parent=39 // pred_check
          %p233 = pneg %p38
        $region42: #{tpu_custom_call.1} parent=39 // pred_check_branch
          %235 = sbr.rel (%p233) target = $region44
        $region43: #{tpu_custom_call.1} parent=39 // pred_region
          %s236 = smul.u32 2, %s18
          %p237 = scmp.lt.s32.totalorder %s236, 3
          %s238 = scalar_select %p237, %s236, 3
          %s239 = scalar_lea.vmem %s0, %s238
          %s240 = smul.u32 2, %s18
        $region44: #{tpu_custom_call.1} parent=39 // pred_fallthru
          _
      $region40: #{tpu_custom_call.1} parent=5 // pred_fallthru
        _
      %p241 = scmp.le.s32.totalorder 1, %s18
      %p242 = scmp.lt.s32.totalorder %s18, 3
      %p243 = pnand %p241, %p242
      %p244 = pneg %p243
      // Predicated region
      $region45: #{tpu_custom_call.1} parent=5 // pred_check
        _
      $region46: #{tpu_custom_call.1} parent=5 // pred_check_branch
        %246 = sbr.rel (%p243) target = $region48
      $region47: #{tpu_custom_call.1} parent=5 // pred_region
        %s247 = ssub.s32 %s18, 1
        %s248 = smul.u32 2, %s23
        %p249 = scmp.lt.s32.totalorder %s248, 3
        %s250 = scalar_select %p249, %s248, 3
        %s251 = scalar_lea.vmem %s0, %s250
        %p252 = pneg %p44
        %p253 = pneg %p41
        %p254 = pneg %p65
        %p255 = pneg %p62
        %p256 = pneg %p86
        %p257 = pneg %p83
        %p258 = pneg %p107
        %p259 = pneg %p104
        %p260 = pneg %p128
        %p261 = pneg %p125
        %p262 = pneg %p149
        %p263 = pneg %p146
        %p264 = pneg %p170
        %p265 = pneg %p167
        %p266 = pneg %p196
        %p267 = pneg %p193
        %s268 = sand.u32 %s183, 1
        %s269 = scalar_lea.sflag [#allocation4], %s268
        %s270 = sand.u32 %s183, 1
        %s271 = smul.addr %s270, 2
        %s272 = scalar_lea.vmem [#allocation3], %s271
        %s273 = smul.u32 2, %s23
        %p274 = scmp.lt.s32.totalorder %s273, 3
        %s275 = scalar_select %p274, %s273, 3
        %s276 = scalar_lea.vmem %s0, %s275
        %s277 = smul.u32 2, %s23
        %s278 = smul.u32 2, %s23
        %v279 = vld [vmem:[%s276] sm:$0x3]
        %v280 = vld [vmem:[%s1] sm:$0xff]
        %v281 = vld [vmem:[%s1 + $0x8] sm:$0xff]
        %v282 = vld [vmem:[%s1 + $0x10] sm:$0xff]
        %v283 = vld [vmem:[%s1 + $0x18] sm:$0xff]
        %v284 = vld [vmem:[%s2] sm:$0xff]
        %v285 = vld [vmem:[%s2 + $0x8] sm:$0xff]
        %v286 = vld [vmem:[%s2 + $0x10] sm:$0xff]
        %v287 = vld [vmem:[%s2 + $0x18] sm:$0xff]
        %289 = vset.pattern.permute.xlu0 0
        %290 = vperm.xlu0 %289, %v280
        %v291 = vpop.permute.xlu0 %290
        %294 = vset.pattern.permute.xlu0 0
        %295 = vperm.xlu0 %294, %v281
        %v296 = vpop.permute.xlu0 %295
        %299 = vset.pattern.permute.xlu0 0
        %300 = vperm.xlu0 %299, %v282
        %v301 = vpop.permute.xlu0 %300
        %304 = vset.pattern.permute.xlu0 0
        %305 = vperm.xlu0 %304, %v283
        %v306 = vpop.permute.xlu0 %305
        %v309 = vperm.slane %v279, 0
        %v310 = vperm.slane %v279, 1
        %v313 = vmul.f32 %v291, %v309
        %v314 = vmul.f32 %v291, %v310
        %v315 = vmul.f32 %v296, %v309
        %v316 = vmul.f32 %v296, %v310
        %v317 = vmul.f32 %v301, %v309
        %v318 = vmul.f32 %v301, %v310
        %v319 = vmul.f32 %v306, %v309
        %v320 = vmul.f32 %v306, %v310
        %322 = vset.pattern.permute.xlu0 0
        %323 = vperm.xlu0 %322, %v284
        %v324 = vpop.permute.xlu0 %323
        %327 = vset.pattern.permute.xlu0 0
        %328 = vperm.xlu0 %327, %v285
        %v329 = vpop.permute.xlu0 %328
        %332 = vset.pattern.permute.xlu0 0
        %333 = vperm.xlu0 %332, %v286
        %v334 = vpop.permute.xlu0 %333
        %337 = vset.pattern.permute.xlu0 0
        %338 = vperm.xlu0 %337, %v287
        %v339 = vpop.permute.xlu0 %338
        %v341 = vadd.f32 %v313, %v324
        %v342 = vadd.f32 %v314, %v324
        %v343 = vadd.f32 %v315, %v329
        %v344 = vadd.f32 %v316, %v329
        %v345 = vadd.f32 %v317, %v334
        %v346 = vadd.f32 %v318, %v334
        %v347 = vadd.f32 %v319, %v339
        %v348 = vadd.f32 %v320, %v339
        %v349 = vmax.f32 %v341, 0.0
        %v350 = vmax.f32 %v342, 0.0
        %v351 = vmax.f32 %v343, 0.0
        %v352 = vmax.f32 %v344, 0.0
        %v353 = vmax.f32 %v345, 0.0
        %v354 = vmax.f32 %v346, 0.0
        %v355 = vmax.f32 %v347, 0.0
        %v356 = vmax.f32 %v348, 0.0
        %v357 = vld [vmem:[%s3] sm:$0xff]
        %v358 = vld [vmem:[%s3 + $0x8] sm:$0xff]
        %v359 = vld [vmem:[%s3 + $0x10] sm:$0xff]
        %v360 = vld [vmem:[%s3 + $0x18] sm:$0xff]
        %v361 = vld [vmem:[%s3 + $0x20] sm:$0xff]
        %v362 = vld [vmem:[%s3 + $0x28] sm:$0xff]
        %v363 = vld [vmem:[%s3 + $0x30] sm:$0xff]
        %v364 = vld [vmem:[%s3 + $0x38] sm:$0xff]
        %v365 = vld [vmem:[%s4] sm:$0xff]
        %v366 = vld [vmem:[%s4 + $0x8] sm:$0xff]
        %v367 = vld [vmem:[%s4 + $0x10] sm:$0xff]
        %v368 = vld [vmem:[%s4 + $0x18] sm:$0xff]
        %v369 = vld [vmem:[%s4 + $0x20] sm:$0xff]
        %v370 = vld [vmem:[%s4 + $0x28] sm:$0xff]
        %v371 = vld [vmem:[%s4 + $0x30] sm:$0xff]
        %v372 = vld [vmem:[%s4 + $0x38] sm:$0xff]
        %374 = vset.pattern.permute.xlu0 0
        %375 = vperm.xlu0 %374, %v365
        %v376 = vpop.permute.xlu0 %375
        %379 = vset.pattern.permute.xlu0 0
        %380 = vperm.xlu0 %379, %v366
        %v381 = vpop.permute.xlu0 %380
        %384 = vset.pattern.permute.xlu0 0
        %385 = vperm.xlu0 %384, %v367
        %v386 = vpop.permute.xlu0 %385
        %389 = vset.pattern.permute.xlu0 0
        %390 = vperm.xlu0 %389, %v368
        %v391 = vpop.permute.xlu0 %390
        %394 = vset.pattern.permute.xlu0 0
        %395 = vperm.xlu0 %394, %v369
        %v396 = vpop.permute.xlu0 %395
        %399 = vset.pattern.permute.xlu0 0
        %400 = vperm.xlu0 %399, %v370
        %v401 = vpop.permute.xlu0 %400
        %404 = vset.pattern.permute.xlu0 0
        %405 = vperm.xlu0 %404, %v371
        %v406 = vpop.permute.xlu0 %405
        %409 = vset.pattern.permute.xlu0 0
        %410 = vperm.xlu0 %409, %v372
        %v411 = vpop.permute.xlu0 %410
        %vm413 = vcmask 261120
        %v415 = vsel %vm413, %v357, 0
        %v418 = vsel %vm413, %v358, 0
        %v421 = vsel %vm413, %v359, 0
        %v424 = vsel %vm413, %v360, 0
        %v427 = vsel %vm413, %v361, 0
        %v430 = vsel %vm413, %v362, 0
        %v433 = vsel %vm413, %v363, 0
        %v436 = vsel %vm413, %v364, 0
        %438 = vmatpush.msra.mxu0 0.0
        %439 = vmatpush.msra.mxu0 0.0
        %440 = vmatpush.msra.mxu0 0.0
        %441 = vmatpush.msra.mxu0 0.0
        %442 = vmatpush.msra.mxu0 0.0
        %443 = vmatpush.msra.mxu0 0.0
        %444 = vmatpush.msra.mxu0 0.0
        %445 = vmatpush.msra.mxu0 0.0
        %446 = vmatpush.msra.mxu0 0.0
        %447 = vmatpush.msra.mxu0 0.0
        %448 = vmatpush.msra.mxu0 0.0
        %449 = vmatpush.msra.mxu0 0.0
        %450 = vmatpush.msra.mxu0 %v355
        %451 = vmatpush.msra.mxu0 %v353
        %452 = vmatpush.msra.mxu0 %v351
        %453 = vmatpush.msra.mxu0 %v349
        %454 = vmatmul.f32.gmra.mxu0 %v415
        %v455 = vpop.f32.mrf.mxu0
        %v456 = vadd.f32 %v376, %v455
        %457 = vmatmul.f32.gmra.mxu0 %v418
        %v458 = vpop.f32.mrf.mxu0
        %v459 = vadd.f32 %v381, %v458
        %460 = vmatmul.f32.gmra.mxu0 %v421
        %v461 = vpop.f32.mrf.mxu0
        %v462 = vadd.f32 %v386, %v461
        %463 = vmatmul.f32.gmra.mxu0 %v424
        %v464 = vpop.f32.mrf.mxu0
        %v465 = vadd.f32 %v391, %v464
        %466 = vmatmul.f32.gmra.mxu0 %v427
        %v467 = vpop.f32.mrf.mxu0
        %v468 = vadd.f32 %v396, %v467
        %469 = vmatmul.f32.gmra.mxu0 %v430
        %v470 = vpop.f32.mrf.mxu0
        %v471 = vadd.f32 %v401, %v470
        %472 = vmatmul.f32.gmra.mxu0 %v433
        %v473 = vpop.f32.mrf.mxu0
        %v474 = vadd.f32 %v406, %v473
        %475 = vmatmul.f32.gmra.mxu0 %v436
        %v476 = vpop.f32.mrf.mxu0
        %v477 = vadd.f32 %v411, %v476
        %478 = vdwg.mxu0
        %479 = vmatpush.msra.mxu0 0.0
        %480 = vmatpush.msra.mxu0 0.0
        %481 = vmatpush.msra.mxu0 0.0
        %482 = vmatpush.msra.mxu0 0.0
        %483 = vmatpush.msra.mxu0 0.0
        %484 = vmatpush.msra.mxu0 0.0
        %485 = vmatpush.msra.mxu0 0.0
        %486 = vmatpush.msra.mxu0 0.0
        %487 = vmatpush.msra.mxu0 0.0
        %488 = vmatpush.msra.mxu0 0.0
        %489 = vmatpush.msra.mxu0 0.0
        %490 = vmatpush.msra.mxu0 0.0
        %491 = vmatpush.msra.mxu0 %v356
        %492 = vmatpush.msra.mxu0 %v354
        %493 = vmatpush.msra.mxu0 %v352
        %494 = vmatpush.msra.mxu0 %v350
        %495 = vmatmul.f32.gmra.mxu0 %v415
        %v496 = vpop.f32.mrf.mxu0
        %v497 = vadd.f32 %v376, %v496
        %498 = vmatmul.f32.gmra.mxu0 %v418
        %v499 = vpop.f32.mrf.mxu0
        %v500 = vadd.f32 %v381, %v499
        %501 = vmatmul.f32.gmra.mxu0 %v421
        %v502 = vpop.f32.mrf.mxu0
        %v503 = vadd.f32 %v386, %v502
        %504 = vmatmul.f32.gmra.mxu0 %v424
        %v505 = vpop.f32.mrf.mxu0
        %v506 = vadd.f32 %v391, %v505
        %507 = vmatmul.f32.gmra.mxu0 %v427
        %v508 = vpop.f32.mrf.mxu0
        %v509 = vadd.f32 %v396, %v508
        %510 = vmatmul.f32.gmra.mxu0 %v430
        %v511 = vpop.f32.mrf.mxu0
        %v512 = vadd.f32 %v401, %v511
        %513 = vmatmul.f32.gmra.mxu0 %v433
        %v514 = vpop.f32.mrf.mxu0
        %v515 = vadd.f32 %v406, %v514
        %516 = vmatmul.f32.gmra.mxu0 %v436
        %v517 = vpop.f32.mrf.mxu0
        %v518 = vadd.f32 %v411, %v517
        %519 = vdwg.mxu0
        %v520 = vmax.f32 %v456, 0.0
        %v521 = vmax.f32 %v497, 0.0
        %v522 = vmax.f32 %v459, 0.0
        %v523 = vmax.f32 %v500, 0.0
        %v524 = vmax.f32 %v462, 0.0
        %v525 = vmax.f32 %v503, 0.0
        %v526 = vmax.f32 %v465, 0.0
        %v527 = vmax.f32 %v506, 0.0
        %v528 = vmax.f32 %v468, 0.0
        %v529 = vmax.f32 %v509, 0.0
        %v530 = vmax.f32 %v471, 0.0
        %v531 = vmax.f32 %v512, 0.0
        %v532 = vmax.f32 %v474, 0.0
        %v533 = vmax.f32 %v515, 0.0
        %v534 = vmax.f32 %v477, 0.0
        %v535 = vmax.f32 %v518, 0.0
        %v536 = vld [vmem:[%s5] sm:$0x1]
        %v537 = vld [vmem:[#allocation2] sm:$0x1]
        %539 = vset.pattern.permute.xlu0 0
        %540 = vperm.xlu0 %539, %v537
        %v541 = vpop.permute.xlu0 %540
        %v543 = vperm.slane %v541, 0
        %vm544 = vcmask 523264
        %v546 = vsel %vm544, %v536, 0
        %548 = vmatpush.msra.mxu0 0.0
        %549 = vmatpush.msra.mxu0 0.0
        %550 = vmatpush.msra.mxu0 0.0
        %551 = vmatpush.msra.mxu0 0.0
        %552 = vmatpush.msra.mxu0 0.0
        %553 = vmatpush.msra.mxu0 0.0
        %554 = vmatpush.msra.mxu0 0.0
        %555 = vmatpush.msra.mxu0 0.0
        %556 = vmatpush.msra.mxu0 %v534
        %557 = vmatpush.msra.mxu0 %v532
        %558 = vmatpush.msra.mxu0 %v530
        %559 = vmatpush.msra.mxu0 %v528
        %560 = vmatpush.msra.mxu0 %v526
        %561 = vmatpush.msra.mxu0 %v524
        %562 = vmatpush.msra.mxu0 %v522
        %563 = vmatpush.msra.mxu0 %v520
        %564 = vmatmul.f32.gmra.mxu0 %v546
        %v565 = vpop.f32.mrf.mxu0
        %v566 = vadd.f32 %v543, %v565
        %567 = vdwg.mxu0
        %568 = vmatpush.msra.mxu0 0.0
        %569 = vmatpush.msra.mxu0 0.0
        %570 = vmatpush.msra.mxu0 0.0
        %571 = vmatpush.msra.mxu0 0.0
        %572 = vmatpush.msra.mxu0 0.0
        %573 = vmatpush.msra.mxu0 0.0
        %574 = vmatpush.msra.mxu0 0.0
        %575 = vmatpush.msra.mxu0 0.0
        %576 = vmatpush.msra.mxu0 %v535
        %577 = vmatpush.msra.mxu0 %v533
        %578 = vmatpush.msra.mxu0 %v531
        %579 = vmatpush.msra.mxu0 %v529
        %580 = vmatpush.msra.mxu0 %v527
        %581 = vmatpush.msra.mxu0 %v525
        %582 = vmatpush.msra.mxu0 %v523
        %583 = vmatpush.msra.mxu0 %v521
        %584 = vmatmul.f32.gmra.mxu0 %v546
        %v585 = vpop.f32.mrf.mxu0
        %v586 = vadd.f32 %v543, %v585
        %587 = vdwg.mxu0
        %v590 = vrot.slane %v586, 7
        %vm591 = vcmask 1040384
        %v592 = vsel %vm591, %v566, %v590
        %v594 = vlaneseq
        %vm595 = vcmp.ge.s32.totalorder %v594, 0
        %vm596 = vcmp.lt.s32.totalorder %v594, 256
        %vm597 = vmand %vm595, %vm596
        %598 = vst.msk [vmem:[%s272] sm:$0x3] %vm597, %v592
        %s599 = sand.u32 %s183, 1
        %s600 = scalar_lea.sflag [#allocation4], %s599
        %s601 = sand.u32 %s183, 1
        %s602 = smul.addr %s601, 2
        %s603 = scalar_lea.vmem [#allocation3], %s602
        // Predicated region
        $region49: #{tpu_custom_call.1} parent=47 // pred_check
          %p604 = pneg %p193
        $region50: #{tpu_custom_call.1} parent=47 // pred_check_branch
          %606 = sbr.rel (%p604) target = $region52
        $region51: #{tpu_custom_call.1} parent=47 // pred_region
          %s607 = smul.u32 2, %s23
          %609 = vsyncadd %s600, 0
          %s610 = scalar_lea.hbm %s7, %s607
          %s612 = sshll.u32 %s603, 4
          %s613 = int_to_ptr.vmem [resolvable:$true] %s612
          %s614 = sshll.u32 %s610, 4
          %s615 = int_to_ptr.hbm [resolvable:$true] %s614
          %617 = dma.vmem_to_hbm [thread:$0]  %s613, 32, %s615, %s600
        $region52: #{tpu_custom_call.1} parent=47 // pred_fallthru
          _
      $region48: #{tpu_custom_call.1} parent=5 // pred_fallthru
        _
      %p618 = scmp.le.s32.totalorder 2, %s18
      // Predicated region
      $region53: #{tpu_custom_call.1} parent=5 // pred_check
        %p619 = pneg %p618
      $region54: #{tpu_custom_call.1} parent=5 // pred_check_branch
        %621 = sbr.rel (%p619) target = $region56
      $region55: #{tpu_custom_call.1} parent=5 // pred_region
        %s622 = ssub.s32 %s18, 2
        // Predicated region
        $region57: #{tpu_custom_call.1} parent=55 // pred_check
          %p623 = pneg %p199
        $region58: #{tpu_custom_call.1} parent=55 // pred_check_branch
          %625 = sbr.rel (%p623) target = $region60
        $region59: #{tpu_custom_call.1} parent=55 // pred_region
          %s626 = sand.u32 %s184, 1
          %s627 = scalar_lea.sflag [#allocation4], %s626
          %s628 = sand.u32 %s184, 1
          %s629 = smul.addr %s628, 2
          %s630 = scalar_lea.vmem [#allocation3], %s629
          %632 = dma.done %s627, 32
        $region60: #{tpu_custom_call.1} parent=55 // pred_fallthru
          _
      $region56: #{tpu_custom_call.1} parent=5 // pred_fallthru
        _
    $region6: #{tpu_custom_call.1} parent=1 // loop_footer
      %s22 = sadd.s32 1, %s18
    $region7: #{tpu_custom_call.1} parent=1 // loop_footer_branch
      %17 = sbr.rel target = $region3
    $region8: #{tpu_custom_call.1} parent=1 // loop_exit
      _
    %633 = vsyncpa [#allocation4], 1
    %s634 = scalar_lea.sflag [#allocation4], 1
    %635 = vsyncpa %s634, 1

// kernel: tpu_custom_call.1
$region0: #{tpu_custom_call.1}
  #allocation0 [shape = 'u32[]', space=smem, size = 0x4, offset = 0x4, fixed_abs, tag = 'smem constant byte address 0x4 - core index']
  #allocation1 [shape = 'u32[72,128]{1,0:T(1,128)}', space=vmem, size = 0x9000, scoped, tag = 'internal scratch']
  #allocation2 [shape = 'f32[1,1]{1,0:T(1,128)S(1)}', space=vmem, size = 0x200, scoped, tag = 'scoped memory for tpu_custom_call.1']
  %s0 = inlined_call_operand.vmem [shape: f32[1,512], index: 0, kind: input, shape index: {}]
  %s1 = inlined_call_operand.vmem [shape: f32[32,1], index: 1, kind: input, shape index: {}]
  %s2 = inlined_call_operand.vmem [shape: f32[32,1], index: 2, kind: input, shape index: {}]
  %s3 = inlined_call_operand.vmem [shape: f32[64,32], index: 3, kind: input, shape index: {}]
  %s4 = inlined_call_operand.vmem [shape: f32[64,1], index: 4, kind: input, shape index: {}]
  %s5 = inlined_call_operand.vmem [shape: f32[1,64], index: 5, kind: input, shape index: {}]
  %s6 = inlined_call_operand.<no memory space> [shape: f32[1,1], index: 6, kind: input, shape index: {}]
  %s7 = inlined_call_operand.hbm [shape: f32[1,512], index: 7, kind: output, shape index: {}]
  %s8 = sld [smem:[#allocation0]]
  $region61: #{tpu_custom_call.1} parent=0
    _
  %s10 = ssub.s32 1, %s8
  %s11 = scalar_select 0, %s10, %s8
  %v12 = vstv %s6
  %13 = vst [vmem:[#allocation2] sm:$0x1] %v12
  $region1: #{tpu_custom_call.1} parent=0
    #allocation3 [shape = 'u8[2048]{0}', space=vmem, size = 0x800, scoped, tag = 'output window, operand 0']
    #allocation4 [shape = 's32[2]{0}', space=sflag, size = 0x8, scoped, tag = 'scoped memory for tpu_custom_call.1']
    %14 = vsyncpa [#allocation4], 0
    %s15 = scalar_lea.sflag [#allocation4], 1
    %16 = vsyncpa %s15, 0
    loop: start=0, step=1, limit=4
    $region2: #{tpu_custom_call.1} parent=1 // loop_pre_header
      _
    $region3: #{tpu_custom_call.1} parent=1 // loop_header
      %s18 = sphi 0, %s22
      %p19 = scmp.ge.s32.totalorder %s18, 4
      %s28 = sphi 0, %s30
      %s31 = sphi 0, %s28
      %s32 = sphi 0, %s31
      %s48 = sphi 0, %s32
      %s52 = sphi 0, %s52
      %s54 = sphi 0, %s52
      %s55 = sphi 0, %s54
      %s69 = sphi 0, %s55
      %s73 = sphi 0, %s73
      %s75 = sphi 0, %s73
      %s76 = sphi 0, %s75
      %s90 = sphi 0, %s76
      %s94 = sphi 0, %s94
      %s96 = sphi 0, %s94
      %s97 = sphi 0, %s96
      %s111 = sphi 0, %s97
      %s115 = sphi 0, %s115
      %s117 = sphi 0, %s115
      %s118 = sphi 0, %s117
      %s132 = sphi 0, %s118
      %s136 = sphi 0, %s136
      %s138 = sphi 0, %s136
      %s139 = sphi 0, %s138
      %s153 = sphi 0, %s139
      %s157 = sphi 0, %s157
      %s159 = sphi 0, %s157
      %s160 = sphi 0, %s159
      %s174 = sphi 0, %s160
      %s180 = sphi 0, %s182
      %s183 = sphi 0, %s180
      %s184 = sphi 0, %s183
      %s200 = sphi 0, %s184
    $region4: #{tpu_custom_call.1} parent=1 // loop_header_branch
      %21 = sbr.rel (%p19) target = $region8
    $region5: #{tpu_custom_call.1} parent=1 // loop_body
      %s23 = ssub.s32 %s18, 1
      %s24 = ssub.s32 %s18, 2
      %s25 = sadd.s32 %s18, 1
      %s26 = ssub.s32 %s18, %s25
      %p27 = scmp.eq.s32.totalorder %s26, 0
      %s29 = sadd.s32 %s28, 1
      %s30 = scalar_select %p27, %s28, %s29
      %p33 = pneg %p27
      %p34 = scmp.eq.s32.totalorder %s18, 1
      %p35 = por %p33, %p34
      %p36 = scmp.ne.s32.totalorder %s28, %s31
      %p37 = scmp.eq.s32.totalorder %s18, 0
      %p38 = por %p36, %p37
      %p39 = scmp.ne.s32.totalorder %s28, %s31
      %p40 = scmp.eq.s32.totalorder %s23, 1
      %p41 = por %p39, %p40
      %p42 = scmp.ne.s32.totalorder %s31, %s32
      %p43 = scmp.eq.s32.totalorder %s23, 0
      %p44 = por %p42, %p43
      %p45 = scmp.ne.s32.totalorder %s31, %s32
      %p46 = scmp.eq.s32.totalorder %s24, 1
      %p47 = por %p45, %p46
      %p49 = scmp.ne.s32.totalorder %s32, %s48
      %p50 = scmp.eq.s32.totalorder %s24, 0
      %p51 = por %p49, %p50
      %s53 = sadd.s32 %s52, 1
      %p56 = scmp.eq.s32.totalorder %s18, 1
      %p57 = scmp.ne.s32.totalorder %s52, %s54
      %p58 = scmp.eq.s32.totalorder %s18, 0
      %p59 = por %p57, %p58
      %p60 = scmp.ne.s32.totalorder %s52, %s54
      %p61 = scmp.eq.s32.totalorder %s23, 1
      %p62 = por %p60, %p61
      %p63 = scmp.ne.s32.totalorder %s54, %s55
      %p64 = scmp.eq.s32.totalorder %s23, 0
      %p65 = por %p63, %p64
      %p66 = scmp.ne.s32.totalorder %s54, %s55
      %p67 = scmp.eq.s32.totalorder %s24, 1
      %p68 = por %p66, %p67
      %p70 = scmp.ne.s32.totalorder %s55, %s69
      %p71 = scmp.eq.s32.totalorder %s24, 0
      %p72 = por %p70, %p71
      %s74 = sadd.s32 %s73, 1
      %p77 = scmp.eq.s32.totalorder %s18, 1
      %p78 = scmp.ne.s32.totalorder %s73, %s75
      %p79 = scmp.eq.s32.totalorder %s18, 0
      %p80 = por %p78, %p79
      %p81 = scmp.ne.s32.totalorder %s73, %s75
      %p82 = scmp.eq.s32.totalorder %s23, 1
      %p83 = por %p81, %p82
      %p84 = scmp.ne.s32.totalorder %s75, %s76
      %p85 = scmp.eq.s32.totalorder %s23, 0
      %p86 = por %p84, %p85
      %p87 = scmp.ne.s32.totalorder %s75, %s76
      %p88 = scmp.eq.s32.totalorder %s24, 1
      %p89 = por %p87, %p88
      %p91 = scmp.ne.s32.totalorder %s76, %s90
      %p92 = scmp.eq.s32.totalorder %s24, 0
      %p93 = por %p91, %p92
      %s95 = sadd.s32 %s94, 1
      %p98 = scmp.eq.s32.totalorder %s18, 1
      %p99 = scmp.ne.s32.totalorder %s94, %s96
      %p100 = scmp.eq.s32.totalorder %s18, 0
      %p101 = por %p99, %p100
      %p102 = scmp.ne.s32.totalorder %s94, %s96
      %p103 = scmp.eq.s32.totalorder %s23, 1
      %p104 = por %p102, %p103
      %p105 = scmp.ne.s32.totalorder %s96, %s97
      %p106 = scmp.eq.s32.totalorder %s23, 0
      %p107 = por %p105, %p106
      %p108 = scmp.ne.s32.totalorder %s96, %s97
      %p109 = scmp.eq.s32.totalorder %s24, 1
      %p110 = por %p108, %p109
      %p112 = scmp.ne.s32.totalorder %s97, %s111
      %p113 = scmp.eq.s32.totalorder %s24, 0
      %p114 = por %p112, %p113
      %s116 = sadd.s32 %s115, 1
      %p119 = scmp.eq.s32.totalorder %s18, 1
      %p120 = scmp.ne.s32.totalorder %s115, %s117
      %p121 = scmp.eq.s32.totalorder %s18, 0
      %p122 = por %p120, %p121
      %p123 = scmp.ne.s32.totalorder %s115, %s117
      %p124 = scmp.eq.s32.totalorder %s23, 1
      %p125 = por %p123, %p124
      %p126 = scmp.ne.s32.totalorder %s117, %s118
      %p127 = scmp.eq.s32.totalorder %s23, 0
      %p128 = por %p126, %p127
      %p129 = scmp.ne.s32.totalorder %s117, %s118
      %p130 = scmp.eq.s32.totalorder %s24, 1
      %p131 = por %p129, %p130
      %p133 = scmp.ne.s32.totalorder %s118, %s132
      %p134 = scmp.eq.s32.totalorder %s24, 0
      %p135 = por %p133, %p134
      %s137 = sadd.s32 %s136, 1
      %p140 = scmp.eq.s32.totalorder %s18, 1
      %p141 = scmp.ne.s32.totalorder %s136, %s138
      %p142 = scmp.eq.s32.totalorder %s18, 0
      %p143 = por %p141, %p142
      %p144 = scmp.ne.s32.totalorder %s136, %s138
      %p145 = scmp.eq.s32.totalorder %s23, 1
      %p146 = por %p144, %p145
      %p147 = scmp.ne.s32.totalorder %s138, %s139
      %p148 = scmp.eq.s32.totalorder %s23, 0
      %p149 = por %p147, %p148
      %p150 = scmp.ne.s32.totalorder %s138, %s139
      %p151 = scmp.eq.s32.totalorder %s24, 1
      %p152 = por %p150, %p151
      %p154 = scmp.ne.s32.totalorder %s139, %s153
      %p155 = scmp.eq.s32.totalorder %s24, 0
      %p156 = por %p154, %p155
      %s158 = sadd.s32 %s157, 1
      %p161 = scmp.eq.s32.totalorder %s18, 1
      %p162 = scmp.ne.s32.totalorder %s157, %s159
      %p163 = scmp.eq.s32.totalorder %s18, 0
      %p164 = por %p162, %p163
      %p165 = scmp.ne.s32.totalorder %s157, %s159
      %p166 = scmp.eq.s32.totalorder %s23, 1
      %p167 = por %p165, %p166
      %p168 = scmp.ne.s32.totalorder %s159, %s160
      %p169 = scmp.eq.s32.totalorder %s23, 0
      %p170 = por %p168, %p169
      %p171 = scmp.ne.s32.totalorder %s159, %s160
      %p172 = scmp.eq.s32.totalorder %s24, 1
      %p173 = por %p171, %p172
      %p175 = scmp.ne.s32.totalorder %s160, %s174
      %p176 = scmp.eq.s32.totalorder %s24, 0
      %p177 = por %p175, %p176
      %s178 = ssub.s32 %s18, %s25
      %p179 = scmp.eq.s32.totalorder %s178, 0
      %s181 = sadd.s32 %s180, 1
      %s182 = scalar_select %p179, %s180, %s181
      %p185 = pneg %p179
      %p186 = scmp.eq.s32.totalorder %s18, 1
      %p187 = por %p185, %p186
      %p188 = scmp.ne.s32.totalorder %s180, %s183
      %p189 = scmp.eq.s32.totalorder %s18, 0
      %p190 = por %p188, %p189
      %p191 = scmp.ne.s32.totalorder %s180, %s183
      %p192 = scmp.eq.s32.totalorder %s23, 1
      %p193 = por %p191, %p192
      %p194 = scmp.ne.s32.totalorder %s183, %s184
      %p195 = scmp.eq.s32.totalorder %s23, 0
      %p196 = por %p194, %p195
      %p197 = scmp.ne.s32.totalorder %s183, %s184
      %p198 = scmp.eq.s32.totalorder %s24, 1
      %p199 = por %p197, %p198
      %p201 = scmp.ne.s32.totalorder %s184, %s200
      %p202 = scmp.eq.s32.totalorder %s24, 0
      %p203 = por %p201, %p202
      %p204 = scmp.le.s32.totalorder 1, %s18
      %p205 = scmp.lt.s32.totalorder %s18, 3
      %p206 = pnand %p204, %p205
      %p207 = pneg %p206
      // Predicated region
      $region9: #{tpu_custom_call.1} parent=5 // pred_check
        _
      $region10: #{tpu_custom_call.1} parent=5 // pred_check_branch
        %209 = sbr.rel (%p206) target = $region12
      $region11: #{tpu_custom_call.1} parent=5 // pred_region
        %s210 = ssub.s32 %s18, 1
        // Predicated region
        $region13: #{tpu_custom_call.1} parent=11 // pred_check
          %p211 = pneg %p65
        $region14: #{tpu_custom_call.1} parent=11 // pred_check_branch
          %213 = sbr.rel (%p211) target = $region16
        $region15: #{tpu_custom_call.1} parent=11 // pred_region
          _
        $region16: #{tpu_custom_call.1} parent=11 // pred_fallthru
          _
        // Predicated region
        $region17: #{tpu_custom_call.1} parent=11 // pred_check
          %p214 = pneg %p86
        $region18: #{tpu_custom_call.1} parent=11 // pred_check_branch
          %216 = sbr.rel (%p214) target = $region20
        $region19: #{tpu_custom_call.1} parent=11 // pred_region
          _
        $region20: #{tpu_custom_call.1} parent=11 // pred_fallthru
          _
        // Predicated region
        $region21: #{tpu_custom_call.1} parent=11 // pred_check
          %p217 = pneg %p107
        $region22: #{tpu_custom_call.1} parent=11 // pred_check_branch
          %219 = sbr.rel (%p217) target = $region24
        $region23: #{tpu_custom_call.1} parent=11 // pred_region
          _
        $region24: #{tpu_custom_call.1} parent=11 // pred_fallthru
          _
        // Predicated region
        $region25: #{tpu_custom_call.1} parent=11 // pred_check
          %p220 = pneg %p128
        $region26: #{tpu_custom_call.1} parent=11 // pred_check_branch
          %222 = sbr.rel (%p220) target = $region28
        $region27: #{tpu_custom_call.1} parent=11 // pred_region
          _
        $region28: #{tpu_custom_call.1} parent=11 // pred_fallthru
          _
        // Predicated region
        $region29: #{tpu_custom_call.1} parent=11 // pred_check
          %p223 = pneg %p149
        $region30: #{tpu_custom_call.1} parent=11 // pred_check_branch
          %225 = sbr.rel (%p223) target = $region32
        $region31: #{tpu_custom_call.1} parent=11 // pred_region
          _
        $region32: #{tpu_custom_call.1} parent=11 // pred_fallthru
          _
        // Predicated region
        $region33: #{tpu_custom_call.1} parent=11 // pred_check
          %p226 = pneg %p170
        $region34: #{tpu_custom_call.1} parent=11 // pred_check_branch
          %228 = sbr.rel (%p226) target = $region36
        $region35: #{tpu_custom_call.1} parent=11 // pred_region
          _
        $region36: #{tpu_custom_call.1} parent=11 // pred_fallthru
          _
      $region12: #{tpu_custom_call.1} parent=5 // pred_fallthru
        _
      %p229 = scmp.lt.s32.totalorder %s18, 2
      // Predicated region
      $region37: #{tpu_custom_call.1} parent=5 // pred_check
        %p230 = pneg %p229
      $region38: #{tpu_custom_call.1} parent=5 // pred_check_branch
        %232 = sbr.rel (%p230) target = $region40
      $region39: #{tpu_custom_call.1} parent=5 // pred_region
        // Predicated region
        $region41: #{tpu_custom_call.1} parent=39 // pred_check
          %p233 = pneg %p38
        $region42: #{tpu_custom_call.1} parent=39 // pred_check_branch
          %235 = sbr.rel (%p233) target = $region44
        $region43: #{tpu_custom_call.1} parent=39 // pred_region
          %s236 = smul.u32 2, %s18
          %p237 = scmp.lt.s32.totalorder %s236, 3
          %s238 = scalar_select %p237, %s236, 3
          %s239 = scalar_lea.vmem %s0, %s238
          %s240 = smul.u32 2, %s18
        $region44: #{tpu_custom_call.1} parent=39 // pred_fallthru
          _
      $region40: #{tpu_custom_call.1} parent=5 // pred_fallthru
        _
      %p241 = scmp.le.s32.totalorder 1, %s18
      %p242 = scmp.lt.s32.totalorder %s18, 3
      %p243 = pnand %p241, %p242
      %p244 = pneg %p243
      // Predicated region
      $region45: #{tpu_custom_call.1} parent=5 // pred_check
        _
      $region46: #{tpu_custom_call.1} parent=5 // pred_check_branch
        %246 = sbr.rel (%p243) target = $region48
      $region47: #{tpu_custom_call.1} parent=5 // pred_region
        %s247 = ssub.s32 %s18, 1
        %s248 = smul.u32 2, %s23
        %p249 = scmp.lt.s32.totalorder %s248, 3
        %s250 = scalar_select %p249, %s248, 3
        %s251 = scalar_lea.vmem %s0, %s250
        %p252 = pneg %p44
        %p253 = pneg %p41
        %p254 = pneg %p65
        %p255 = pneg %p62
        %p256 = pneg %p86
        %p257 = pneg %p83
        %p258 = pneg %p107
        %p259 = pneg %p104
        %p260 = pneg %p128
        %p261 = pneg %p125
        %p262 = pneg %p149
        %p263 = pneg %p146
        %p264 = pneg %p170
        %p265 = pneg %p167
        %p266 = pneg %p196
        %p267 = pneg %p193
        %s268 = sand.u32 %s183, 1
        %s269 = scalar_lea.sflag [#allocation4], %s268
        %s270 = sand.u32 %s183, 1
        %s271 = smul.addr %s270, 2
        %s272 = scalar_lea.vmem [#allocation3], %s271
        %s273 = smul.u32 2, %s23
        %p274 = scmp.lt.s32.totalorder %s273, 3
        %s275 = scalar_select %p274, %s273, 3
        %s276 = scalar_lea.vmem %s0, %s275
        %s277 = smul.u32 2, %s23
        %s278 = smul.u32 2, %s23
        %v279 = vld [vmem:[%s276] sm:$0x3]
        %v280 = vld [vmem:[%s1] sm:$0xff]
        %v281 = vld [vmem:[%s1 + $0x8] sm:$0xff]
        %v282 = vld [vmem:[%s1 + $0x10] sm:$0xff]
        %v283 = vld [vmem:[%s1 + $0x18] sm:$0xff]
        %v284 = vld [vmem:[%s2] sm:$0xff]
        %v285 = vld [vmem:[%s2 + $0x8] sm:$0xff]
        %v286 = vld [vmem:[%s2 + $0x10] sm:$0xff]
        %v287 = vld [vmem:[%s2 + $0x18] sm:$0xff]
        %289 = vset.pattern.permute.xlu0 0
        %290 = vperm.xlu0 %289, %v280
        %v291 = vpop.permute.xlu0 %290
        %294 = vset.pattern.permute.xlu0 0
        %295 = vperm.xlu0 %294, %v281
        %v296 = vpop.permute.xlu0 %295
        %299 = vset.pattern.permute.xlu0 0
        %300 = vperm.xlu0 %299, %v282
        %v301 = vpop.permute.xlu0 %300
        %304 = vset.pattern.permute.xlu0 0
        %305 = vperm.xlu0 %304, %v283
        %v306 = vpop.permute.xlu0 %305
        %v309 = vperm.slane %v279, 0
        %v310 = vperm.slane %v279, 1
        %v313 = vmul.f32 %v291, %v309
        %v314 = vmul.f32 %v291, %v310
        %v315 = vmul.f32 %v296, %v309
        %v316 = vmul.f32 %v296, %v310
        %v317 = vmul.f32 %v301, %v309
        %v318 = vmul.f32 %v301, %v310
        %v319 = vmul.f32 %v306, %v309
        %v320 = vmul.f32 %v306, %v310
        %322 = vset.pattern.permute.xlu0 0
        %323 = vperm.xlu0 %322, %v284
        %v324 = vpop.permute.xlu0 %323
        %327 = vset.pattern.permute.xlu0 0
        %328 = vperm.xlu0 %327, %v285
        %v329 = vpop.permute.xlu0 %328
        %332 = vset.pattern.permute.xlu0 0
        %333 = vperm.xlu0 %332, %v286
        %v334 = vpop.permute.xlu0 %333
        %337 = vset.pattern.permute.xlu0 0
        %338 = vperm.xlu0 %337, %v287
        %v339 = vpop.permute.xlu0 %338
        %v341 = vadd.f32 %v313, %v324
        %v342 = vadd.f32 %v314, %v324
        %v343 = vadd.f32 %v315, %v329
        %v344 = vadd.f32 %v316, %v329
        %v345 = vadd.f32 %v317, %v334
        %v346 = vadd.f32 %v318, %v334
        %v347 = vadd.f32 %v319, %v339
        %v348 = vadd.f32 %v320, %v339
        %v349 = vmax.f32 %v341, 0.0
        %v350 = vmax.f32 %v342, 0.0
        %v351 = vmax.f32 %v343, 0.0
        %v352 = vmax.f32 %v344, 0.0
        %v353 = vmax.f32 %v345, 0.0
        %v354 = vmax.f32 %v346, 0.0
        %v355 = vmax.f32 %v347, 0.0
        %v356 = vmax.f32 %v348, 0.0
        %v357 = vld [vmem:[%s3] sm:$0xff]
        %v358 = vld [vmem:[%s3 + $0x8] sm:$0xff]
        %v359 = vld [vmem:[%s3 + $0x10] sm:$0xff]
        %v360 = vld [vmem:[%s3 + $0x18] sm:$0xff]
        %v361 = vld [vmem:[%s3 + $0x20] sm:$0xff]
        %v362 = vld [vmem:[%s3 + $0x28] sm:$0xff]
        %v363 = vld [vmem:[%s3 + $0x30] sm:$0xff]
        %v364 = vld [vmem:[%s3 + $0x38] sm:$0xff]
        %v365 = vld [vmem:[%s4] sm:$0xff]
        %v366 = vld [vmem:[%s4 + $0x8] sm:$0xff]
        %v367 = vld [vmem:[%s4 + $0x10] sm:$0xff]
        %v368 = vld [vmem:[%s4 + $0x18] sm:$0xff]
        %v369 = vld [vmem:[%s4 + $0x20] sm:$0xff]
        %v370 = vld [vmem:[%s4 + $0x28] sm:$0xff]
        %v371 = vld [vmem:[%s4 + $0x30] sm:$0xff]
        %v372 = vld [vmem:[%s4 + $0x38] sm:$0xff]
        %374 = vset.pattern.permute.xlu0 0
        %375 = vperm.xlu0 %374, %v365
        %v376 = vpop.permute.xlu0 %375
        %379 = vset.pattern.permute.xlu0 0
        %380 = vperm.xlu0 %379, %v366
        %v381 = vpop.permute.xlu0 %380
        %384 = vset.pattern.permute.xlu0 0
        %385 = vperm.xlu0 %384, %v367
        %v386 = vpop.permute.xlu0 %385
        %389 = vset.pattern.permute.xlu0 0
        %390 = vperm.xlu0 %389, %v368
        %v391 = vpop.permute.xlu0 %390
        %394 = vset.pattern.permute.xlu0 0
        %395 = vperm.xlu0 %394, %v369
        %v396 = vpop.permute.xlu0 %395
        %399 = vset.pattern.permute.xlu0 0
        %400 = vperm.xlu0 %399, %v370
        %v401 = vpop.permute.xlu0 %400
        %404 = vset.pattern.permute.xlu0 0
        %405 = vperm.xlu0 %404, %v371
        %v406 = vpop.permute.xlu0 %405
        %409 = vset.pattern.permute.xlu0 0
        %410 = vperm.xlu0 %409, %v372
        %v411 = vpop.permute.xlu0 %410
        %vm413 = vcmask 261120
        %v415 = vsel %vm413, %v357, 0
        %v418 = vsel %vm413, %v358, 0
        %v421 = vsel %vm413, %v359, 0
        %v424 = vsel %vm413, %v360, 0
        %v427 = vsel %vm413, %v361, 0
        %v430 = vsel %vm413, %v362, 0
        %v433 = vsel %vm413, %v363, 0
        %v436 = vsel %vm413, %v364, 0
        %438 = vmatpush.msra.mxu0 0.0
        %439 = vmatpush.msra.mxu0 0.0
        %440 = vmatpush.msra.mxu0 0.0
        %441 = vmatpush.msra.mxu0 0.0
        %442 = vmatpush.msra.mxu0 0.0
        %443 = vmatpush.msra.mxu0 0.0
        %444 = vmatpush.msra.mxu0 0.0
        %445 = vmatpush.msra.mxu0 0.0
        %446 = vmatpush.msra.mxu0 0.0
        %447 = vmatpush.msra.mxu0 0.0
        %448 = vmatpush.msra.mxu0 0.0
        %449 = vmatpush.msra.mxu0 0.0
        %450 = vmatpush.msra.mxu0 %v355
        %451 = vmatpush.msra.mxu0 %v353
        %452 = vmatpush.msra.mxu0 %v351
        %453 = vmatpush.msra.mxu0 %v349
        %454 = vmatmul.f32.gmra.mxu0 %v415
        %v455 = vpop.f32.mrf.mxu0
        %v456 = vadd.f32 %v376, %v455
        %457 = vmatmul.f32.gmra.mxu0 %v418
        %v458 = vpop.f32.mrf.mxu0
        %v459 = vadd.f32 %v381, %v458
        %460 = vmatmul.f32.gmra.mxu0 %v421
        %v461 = vpop.f32.mrf.mxu0
        %v462 = vadd.f32 %v386, %v461
        %463 = vmatmul.f32.gmra.mxu0 %v424
        %v464 = vpop.f32.mrf.mxu0
        %v465 = vadd.f32 %v391, %v464
        %466 = vmatmul.f32.gmra.mxu0 %v427
        %v467 = vpop.f32.mrf.mxu0
        %v468 = vadd.f32 %v396, %v467
        %469 = vmatmul.f32.gmra.mxu0 %v430
        %v470 = vpop.f32.mrf.mxu0
        %v471 = vadd.f32 %v401, %v470
        %472 = vmatmul.f32.gmra.mxu0 %v433
        %v473 = vpop.f32.mrf.mxu0
        %v474 = vadd.f32 %v406, %v473
        %475 = vmatmul.f32.gmra.mxu0 %v436
        %v476 = vpop.f32.mrf.mxu0
        %v477 = vadd.f32 %v411, %v476
        %478 = vdwg.mxu0
        %479 = vmatpush.msra.mxu0 0.0
        %480 = vmatpush.msra.mxu0 0.0
        %481 = vmatpush.msra.mxu0 0.0
        %482 = vmatpush.msra.mxu0 0.0
        %483 = vmatpush.msra.mxu0 0.0
        %484 = vmatpush.msra.mxu0 0.0
        %485 = vmatpush.msra.mxu0 0.0
        %486 = vmatpush.msra.mxu0 0.0
        %487 = vmatpush.msra.mxu0 0.0
        %488 = vmatpush.msra.mxu0 0.0
        %489 = vmatpush.msra.mxu0 0.0
        %490 = vmatpush.msra.mxu0 0.0
        %491 = vmatpush.msra.mxu0 %v356
        %492 = vmatpush.msra.mxu0 %v354
        %493 = vmatpush.msra.mxu0 %v352
        %494 = vmatpush.msra.mxu0 %v350
        %495 = vmatmul.f32.gmra.mxu0 %v415
        %v496 = vpop.f32.mrf.mxu0
        %v497 = vadd.f32 %v376, %v496
        %498 = vmatmul.f32.gmra.mxu0 %v418
        %v499 = vpop.f32.mrf.mxu0
        %v500 = vadd.f32 %v381, %v499
        %501 = vmatmul.f32.gmra.mxu0 %v421
        %v502 = vpop.f32.mrf.mxu0
        %v503 = vadd.f32 %v386, %v502
        %504 = vmatmul.f32.gmra.mxu0 %v424
        %v505 = vpop.f32.mrf.mxu0
        %v506 = vadd.f32 %v391, %v505
        %507 = vmatmul.f32.gmra.mxu0 %v427
        %v508 = vpop.f32.mrf.mxu0
        %v509 = vadd.f32 %v396, %v508
        %510 = vmatmul.f32.gmra.mxu0 %v430
        %v511 = vpop.f32.mrf.mxu0
        %v512 = vadd.f32 %v401, %v511
        %513 = vmatmul.f32.gmra.mxu0 %v433
        %v514 = vpop.f32.mrf.mxu0
        %v515 = vadd.f32 %v406, %v514
        %516 = vmatmul.f32.gmra.mxu0 %v436
        %v517 = vpop.f32.mrf.mxu0
        %v518 = vadd.f32 %v411, %v517
        %519 = vdwg.mxu0
        %v520 = vmax.f32 %v456, 0.0
        %v521 = vmax.f32 %v497, 0.0
        %v522 = vmax.f32 %v459, 0.0
        %v523 = vmax.f32 %v500, 0.0
        %v524 = vmax.f32 %v462, 0.0
        %v525 = vmax.f32 %v503, 0.0
        %v526 = vmax.f32 %v465, 0.0
        %v527 = vmax.f32 %v506, 0.0
        %v528 = vmax.f32 %v468, 0.0
        %v529 = vmax.f32 %v509, 0.0
        %v530 = vmax.f32 %v471, 0.0
        %v531 = vmax.f32 %v512, 0.0
        %v532 = vmax.f32 %v474, 0.0
        %v533 = vmax.f32 %v515, 0.0
        %v534 = vmax.f32 %v477, 0.0
        %v535 = vmax.f32 %v518, 0.0
        %v536 = vld [vmem:[%s5] sm:$0x1]
        %v537 = vld [vmem:[#allocation2] sm:$0x1]
        %539 = vset.pattern.permute.xlu0 0
        %540 = vperm.xlu0 %539, %v537
        %v541 = vpop.permute.xlu0 %540
        %v543 = vperm.slane %v541, 0
        %vm544 = vcmask 523264
        %v546 = vsel %vm544, %v536, 0
        %548 = vmatpush.msra.mxu0 0.0
        %549 = vmatpush.msra.mxu0 0.0
        %550 = vmatpush.msra.mxu0 0.0
        %551 = vmatpush.msra.mxu0 0.0
        %552 = vmatpush.msra.mxu0 0.0
        %553 = vmatpush.msra.mxu0 0.0
        %554 = vmatpush.msra.mxu0 0.0
        %555 = vmatpush.msra.mxu0 0.0
        %556 = vmatpush.msra.mxu0 %v534
        %557 = vmatpush.msra.mxu0 %v532
        %558 = vmatpush.msra.mxu0 %v530
        %559 = vmatpush.msra.mxu0 %v528
        %560 = vmatpush.msra.mxu0 %v526
        %561 = vmatpush.msra.mxu0 %v524
        %562 = vmatpush.msra.mxu0 %v522
        %563 = vmatpush.msra.mxu0 %v520
        %564 = vmatmul.f32.gmra.mxu0 %v546
        %v565 = vpop.f32.mrf.mxu0
        %v566 = vadd.f32 %v543, %v565
        %567 = vdwg.mxu0
        %568 = vmatpush.msra.mxu0 0.0
        %569 = vmatpush.msra.mxu0 0.0
        %570 = vmatpush.msra.mxu0 0.0
        %571 = vmatpush.msra.mxu0 0.0
        %572 = vmatpush.msra.mxu0 0.0
        %573 = vmatpush.msra.mxu0 0.0
        %574 = vmatpush.msra.mxu0 0.0
        %575 = vmatpush.msra.mxu0 0.0
        %576 = vmatpush.msra.mxu0 %v535
        %577 = vmatpush.msra.mxu0 %v533
        %578 = vmatpush.msra.mxu0 %v531
        %579 = vmatpush.msra.mxu0 %v529
        %580 = vmatpush.msra.mxu0 %v527
        %581 = vmatpush.msra.mxu0 %v525
        %582 = vmatpush.msra.mxu0 %v523
        %583 = vmatpush.msra.mxu0 %v521
        %584 = vmatmul.f32.gmra.mxu0 %v546
        %v585 = vpop.f32.mrf.mxu0
        %v586 = vadd.f32 %v543, %v585
        %587 = vdwg.mxu0
        %v590 = vrot.slane %v586, 7
        %vm591 = vcmask 1040384
        %v592 = vsel %vm591, %v566, %v590
        %v594 = vlaneseq
        %vm595 = vcmp.ge.s32.totalorder %v594, 0
        %vm596 = vcmp.lt.s32.totalorder %v594, 256
        %vm597 = vmand %vm595, %vm596
        %598 = vst.msk [vmem:[%s272] sm:$0x3] %vm597, %v592
        %s599 = sand.u32 %s183, 1
        %s600 = scalar_lea.sflag [#allocation4], %s599
        %s601 = sand.u32 %s183, 1
        %s602 = smul.addr %s601, 2
        %s603 = scalar_lea.vmem [#allocation3], %s602
        // Predicated region
        $region49: #{tpu_custom_call.1} parent=47 // pred_check
          %p604 = pneg %p193
        $region50: #{tpu_custom_call.1} parent=47 // pred_check_branch
          %606 = sbr.rel (%p604) target = $region52
        $region51: #{tpu_custom_call.1} parent=47 // pred_region
          %s607 = smul.u32 2, %s23
          %609 = vsyncadd %s600, 0
          %s610 = scalar_lea.hbm %s7, %s607
          %s612 = sshll.u32 %s603, 4
          %s613 = int_to_ptr.vmem [resolvable:$true] %s612
          %s614 = sshll.u32 %s610, 4
          %s615 = int_to_ptr.hbm [resolvable:$true] %s614
          %617 = dma.vmem_to_hbm [thread:$0]  %s613, 32, %s615, %s600
        $region52: #{tpu_custom_call.1} parent=47 // pred_fallthru
          _
      $region48: #{tpu_custom_call.1} parent=5 // pred_fallthru
        _
      %p618 = scmp.le.s32.totalorder 2, %s18
      // Predicated region
      $region53: #{tpu_custom_call.1} parent=5 // pred_check
        %p619 = pneg %p618
      $region54: #{tpu_custom_call.1} parent=5 // pred_check_branch
        %621 = sbr.rel (%p619) target = $region56
      $region55: #{tpu_custom_call.1} parent=5 // pred_region
        %s622 = ssub.s32 %s18, 2
        // Predicated region
        $region57: #{tpu_custom_call.1} parent=55 // pred_check
          %p623 = pneg %p199
        $region58: #{tpu_custom_call.1} parent=55 // pred_check_branch
          %625 = sbr.rel (%p623) target = $region60
        $region59: #{tpu_custom_call.1} parent=55 // pred_region
          %s626 = sand.u32 %s184, 1
          %s627 = scalar_lea.sflag [#allocation4], %s626
          %s628 = sand.u32 %s184, 1
          %s629 = smul.addr %s628, 2
          %s630 = scalar_lea.vmem [#allocation3], %s629
          %632 = dma.done %s627, 32
        $region60: #{tpu_custom_call.1} parent=55 // pred_fallthru
          _
      $region56: #{tpu_custom_call.1} parent=5 // pred_fallthru
        _
    $region6: #{tpu_custom_call.1} parent=1 // loop_footer
      %s22 = sadd.s32 1, %s18
    $region7: #{tpu_custom_call.1} parent=1 // loop_footer_branch
      %17 = sbr.rel target = $region3
    $region8: #{tpu_custom_call.1} parent=1 // loop_exit
      _
    %633 = vsyncpa [#allocation4], 1
    %s634 = scalar_lea.sflag [#allocation4], 1
    %635 = vsyncpa %s634, 1

</llo_original>
